<compile_context>
chip_gen: v7x
topology: tpu7x:2x2x1
jax: 0.10.0
libtpu: 0.0.40
codegen_flags: <defaults>
</compile_context>

<pallas_src>
import math
import functools

import jax
import jax.numpy as jnp
from jax.experimental import pallas as pl
from jax.experimental.pallas import tpu as pltpu


def _round_up(a: int, m: int) -> int:
    return ((a + m - 1) // m) * m


def _make_sinusoid_pe(max_len: int, input_dim: int) -> jnp.ndarray:
    """Deterministic buffer setup, matching the PyTorch __init__."""
    position = jnp.arange(0.0, max_len, dtype=jnp.float32)[:, None]            # (L, 1)
    div_term = jnp.exp(jnp.arange(0.0, input_dim, 2.0, dtype=jnp.float32)
                       * (-(math.log(10000.0) / input_dim)))                    # (D/2,)
    angles = position * div_term                                                # (L, D/2)
    pe = jnp.zeros((max_len, input_dim), dtype=jnp.float32)
    pe = pe.at[:, 0::2].set(jnp.sin(angles))
    pe = pe.at[:, 1::2].set(jnp.cos(angles))
    return pe


def _vmem_budgets():
    """(per-tile byte cap, scoped vmem_limit_bytes), generation-aware."""
    vmem = 64 * 1024 * 1024
    try:
        info = pltpu.get_tpu_info()
        vmem = int(getattr(info, "vmem_capacity_bytes", vmem))
    except Exception:
        pass
    if vmem >= 100 * 1024 * 1024:                 # v5e / v6e: 128 MiB physical VMEM
        return 4 * 1024 * 1024, 64 * 1024 * 1024
    return 3 * 1024 * 1024, 48 * 1024 * 1024      # v7x: 64 MiB per TensorCore


def _posemb_kernel(seed_ref, x_ref, pe_ref, o_ref, *,
                   rows_per_tile: int, seq_rows: int,
                   dropout_p: float, training: bool):
    # x_ref / pe_ref / o_ref: (TS, D') VMEM tiles (batch dim squeezed away).
    y = x_ref[...] + pe_ref[...]

    if training and dropout_p > 0.0:
        t = pl.program_id(0)           # seq-tile index (outer grid axis)
        b = pl.program_id(1)           # batch index    (inner grid axis)
        dp = y.shape[1]                # static lane width

        # Global flat element index inside the padded/folded (B, sf, D') tensor.
        # Any deterministic per-element index works; padded rows are sliced off outside.
        row = jax.lax.broadcasted_iota(jnp.int32, y.shape, 0)
        col = jax.lax.broadcasted_iota(jnp.int32, y.shape, 1)
        base = b * (seq_rows * dp) + t * (rows_per_tile * dp)          # int32 scalar
        idx = (base + row * dp + col).astype(jnp.uint32)               # single convert

        # Cheap counter-based PRNG: xorshift - one multiply - xorshift (VPU only).
        h = idx ^ seed_ref[0].astype(jnp.uint32)
        h = h ^ (h >> 16)
        h = h * jnp.uint32(0x21F0AAAD)
        h = h ^ (h >> 15)

        # Integer-domain compare; 1/(1-p) scale folded into the select (inverted dropout).
        threshold = jnp.uint32(min(int(round(dropout_p * (2.0 ** 32))), 2 ** 32 - 1))
        scale = jnp.asarray(1.0 / (1.0 - dropout_p), dtype=y.dtype)
        zero = jnp.asarray(0.0, dtype=y.dtype)
        y = y * jnp.where(h >= threshold, scale, zero)

    o_ref[...] = y.astype(o_ref.dtype)


class PositionEmbedding:
    """JAX/Pallas port of the PyTorch PositionEmbedding module (forward pass)."""

    def __init__(self, input_dim: int, max_len: int = 50, emb_dropout: float = 0.1,
                 dtype=jnp.float32):
        self.input_dim = int(input_dim)
        self.max_len = int(max_len)
        self.dropout_p = float(emb_dropout)

        # Fold factor so the kernel's last (lane) dim is a multiple of 128.
        self.fold = 128 // math.gcd(self.input_dim, 128)
        self.df = self.input_dim * self.fold

        # Hoisted out of forward: the PE buffer, lane-folded and cast exactly once.
        pe = _make_sinusoid_pe(self.max_len, self.input_dim).astype(dtype)
        l_pad = _round_up(self.max_len, self.fold)
        if l_pad > self.max_len:
            pe = jnp.pad(pe, ((0, l_pad - self.max_len), (0, 0)))
        self.l_fold = l_pad // self.fold
        self.pef_full = pe.reshape(self.l_fold, self.df)     # (L_fold, D'), lane-dense

    def __call__(self, x, *, seed: int = 0, training: bool = False):
        B, S, D = x.shape
        assert D == self.input_dim, "input_dim mismatch"
        assert S <= self.max_len, "sequence longer than max_len"
        if training and self.dropout_p > 0.0:
            assert 0.0 <= self.dropout_p < 1.0, "dropout_p must be in [0, 1) when training"

        fold, df = self.fold, self.df
        itemsize = jnp.dtype(x.dtype).itemsize
        sublane = 8 * max(1, 4 // itemsize)        # 8 f32 / 16 bf16 / 32 int8
        tile_cap, vmem_limit = _vmem_budgets()

        # --- Tile selection by size (cdiv grid + padding), not by divisibility of S.
        sf_raw = pl.cdiv(S, fold)                  # folded rows needed to cover S
        bytes_per_row = df * itemsize
        rows_cap = max(sublane, (tile_cap // bytes_per_row) // sublane * sublane)
        ts = min(rows_cap, _round_up(sf_raw, sublane))
        num_ts = pl.cdiv(sf_raw, ts)
        # Make sure both v7x TensorCores get work for single-sequence shapes.
        if B * num_ts < 2 and sf_raw > sublane:
            ts2 = _round_up(pl.cdiv(sf_raw, 2), sublane)
            if ts2 < ts:
                ts, num_ts = ts2, pl.cdiv(sf_raw, ts2)
        sf = num_ts * ts
        S_pad = sf * fold

        if training and self.dropout_p > 0.0:
            assert B * sf * df < 2 ** 31, "dropout counter would overflow 32-bit index"

        # --- Layout: pad the sequence (cheap) so every store is full-lane, full-sublane.
        xp = x if S_pad == S else jnp.pad(x, ((0, 0), (0, S_pad - S), (0, 0)))
        xf = xp.reshape(B, sf, df)                 # contiguous reshape (layout-preserving)

        if sf <= self.l_fold:
            pef = self.pef_full                    # no per-call slice/copy of PE
        else:
            pef = jnp.pad(self.pef_full, ((0, sf - self.l_fold), (0, 0)))
        if pef.dtype != x.dtype:
            pef = pef.astype(x.dtype)              # TODO(synk): cache per-dtype folded PE

        kernel = functools.partial(
            _posemb_kernel, rows_per_tile=ts, seq_rows=sf,
            dropout_p=self.dropout_p, training=bool(training))
        seed_arr = jnp.asarray([seed], dtype=jnp.int32)

        def build_and_run(deep_pipeline: bool):
            stream_kw = {"pipeline_mode": pl.Buffered(3)} if deep_pipeline else {}
            return pl.pallas_call(
                kernel,
                out_shape=jax.ShapeDtypeStruct((B, sf, df), x.dtype),
                grid_spec=pltpu.PrefetchScalarGridSpec(
                    num_scalar_prefetch=1,         # dropout seed lives in SMEM
                    grid=(num_ts, B),              # seq-tile outer -> PE tile resident over batch
                    in_specs=[
                        pl.BlockSpec((None, ts, df), lambda t, b, s: (b, t, 0), **stream_kw),
                        pl.BlockSpec((ts, df), lambda t, b, s: (t, 0)),
                    ],
                    out_specs=pl.BlockSpec((None, ts, df), lambda t, b, s: (b, t, 0), **stream_kw),
                ),
                compiler_params=pltpu.CompilerParams(
                    dimension_semantics=("parallel", "parallel"),
                    vmem_limit_bytes=vmem_limit,
                ),
            )(seed_arr, xf, pef)

        try:
            out = build_and_run(True)              # 3-deep buffering on streamed operands
        except Exception:
            out = build_and_run(False)             # fallback: default double-buffering

        out = out.reshape(B, S_pad, D)
        return out if S_pad == S else out[:, :S, :]


if __name__ == "__main__":
    # Small shapes consistent with the module's forward: x is (batch, seq, input_dim).
    B, S, D = 2, 8, 32
    MAX_LEN = 50

    key = jax.random.PRNGKey(0)
    x = jax.random.normal(key, (B, S, D), dtype=jnp.float32)

    mod = PositionEmbedding(D, max_len=MAX_LEN, emb_dropout=0.1)
    ref = x + _make_sinusoid_pe(MAX_LEN, D)[None, :S, :]

    # Eval mode (dropout = identity): must match x + pe[:S].
    out_eval = jax.block_until_ready(mod(x, training=False))
    assert out_eval.shape == (B, S, D)
    assert jnp.allclose(out_eval, ref, atol=1e-6), "eval-mode mismatch"

    # Training mode: every element must be either 0 or (x + pe) / (1 - p).
    p = 0.1
    out_train = jax.block_until_ready(mod(x, seed=123, training=True))
    assert out_train.shape == (B, S, D)
    scaled = ref / (1.0 - p)
    ok = jnp.isclose(out_train, 0.0, atol=1e-6) | jnp.isclose(out_train, scaled,
                                                              rtol=1e-5, atol=1e-5)
    assert bool(jnp.all(ok)), "training-mode dropout values inconsistent"

    print("KERNEL_OK")
</pallas_src>

<mosaic_0001>
module attributes {stable_mosaic.version = 11 : i64} {
  func.func @_posemb_kernel(%arg0: i32, %arg1: i32, %arg2: memref<1xi32, #tpu.memory_space<smem>>, %arg3: memref<1x8x128xf32, #tpu.memory_space<vmem>>, %arg4: memref<8x128xf32, #tpu.memory_space<vmem>>, %arg5: memref<1x8x128xf32, #tpu.memory_space<vmem>>) attributes {dimension_semantics = [#tpu.dimension_semantics<parallel>, #tpu.dimension_semantics<parallel>], iteration_bounds = array<i64: 1, 2>, scalar_prefetch = 1 : i64, scratch_operands = 0 : i64, tpu.core_type = #tpu.core_type<tc>, window_params = [{transform_indices = @transform_0, window_bounds = array<i64: 1, 8, 128>}, {transform_indices = @transform_1, window_bounds = array<i64: 8, 128>}, {transform_indices = @transform_2, window_bounds = array<i64: 1, 8, 128>}]} {
    %c0 = arith.constant 0 : index
    %c0_0 = arith.constant 0 : index
    %c0_1 = arith.constant 0 : index
    %0 = vector.load %arg3[%c0, %c0_0, %c0_1] : memref<1x8x128xf32, #tpu.memory_space<vmem>>, vector<1x8x128xf32>
    %1 = vector.shape_cast %0 : vector<1x8x128xf32> to vector<8x128xf32>
    %c0_2 = arith.constant 0 : index
    %c0_3 = arith.constant 0 : index
    %2 = vector.load %arg4[%c0_2, %c0_3] : memref<8x128xf32, #tpu.memory_space<vmem>>, vector<8x128xf32>
    %3 = arith.addf %1, %2 : vector<8x128xf32>
    %c0_4 = arith.constant 0 : index
    %c0_5 = arith.constant 0 : index
    %c0_6 = arith.constant 0 : index
    %4 = vector.load %arg5[%c0_4, %c0_5, %c0_6] : memref<1x8x128xf32, #tpu.memory_space<vmem>>, vector<1x8x128xf32>
    %5 = vector.shape_cast %4 : vector<1x8x128xf32> to vector<8x128xf32>
    %6 = vector.shape_cast %3 : vector<8x128xf32> to vector<1x8x128xf32>
    tpu.vector_store %arg5[%c0_4, %c0_5, %c0_6], %6 {strides = array<i32>} : memref<1x8x128xf32, #tpu.memory_space<vmem>>, vector<1x8x128xf32>,
    return
  }
  func.func @transform_0(%arg0: i32, %arg1: i32, %arg2: memref<1xi32, #tpu.memory_space<smem>>) -> (i32, i32, i32) {
    %c0_i32 = arith.constant 0 : i32
    %c0_i32_0 = arith.constant 0 : i32
    return %arg1, %arg0, %c0_i32 : i32, i32, i32
  }
  func.func @transform_1(%arg0: i32, %arg1: i32, %arg2: memref<1xi32, #tpu.memory_space<smem>>) -> (i32, i32) {
    %c0_i32 = arith.constant 0 : i32
    %c0_i32_0 = arith.constant 0 : i32
    return %arg0, %c0_i32 : i32, i32
  }
  func.func @transform_2(%arg0: i32, %arg1: i32, %arg2: memref<1xi32, #tpu.memory_space<smem>>) -> (i32, i32, i32) {
    %c0_i32 = arith.constant 0 : i32
    %c0_i32_0 = arith.constant 0 : i32
    return %arg1, %arg0, %c0_i32 : i32, i32, i32
  }
}

</mosaic_0001>

<llo_original>
// kernel: tpu_custom_call.1
$region0: #{tpu_custom_call.1}
  #allocation0 [shape = 'u32[]', space=smem, size = 0x4, offset = 0x4, fixed_abs, tag = 'smem constant byte address 0x4 - core index']
  #allocation1 [shape = 'u32[144,128]{1,0:T(1,128)}', space=vmem, size = 0x12000, scoped, tag = 'internal scratch']
  #allocation2 [shape = 's32[1]{0}', space=sflag, size = 0x4, scoped, tag = 'scoped memory for tpu_custom_call.1']
  #allocation3 [shape = 's32[1]{0:T(128)S(6)}', space=smem, size = 0x200, scoped, tag = 'prefetched SMEM operand 0']
  %s0 = inlined_call_operand.<no memory space> [shape: s32[1], index: 0, kind: input, shape index: {}]
  %s1 = inlined_call_operand.hbm [shape: f32[2,8,128], index: 1, kind: input, shape index: {}]
  %s2 = inlined_call_operand.hbm [shape: f32[13,128], index: 2, kind: input, shape index: {}]
  %s3 = inlined_call_operand.hbm [shape: f32[2,8,128], index: 3, kind: output, shape index: {}]
  %s4 = sld [smem:[#allocation0]]
  $region49: #{tpu_custom_call.1} parent=0
    _
  %s6 = ssub.s32 1, %s4
  %s7 = scalar_select 0, %s6, %s4
  %8 = sst [smem:[#allocation3]] %s0
  $region1: #{tpu_custom_call.1} parent=0
    #allocation4 [shape = 'u8[8192]{0}', space=vmem, size = 0x2000, scoped, tag = 'input window, operand 1']
    #allocation5 [shape = 's32[2]{0}', space=sflag, size = 0x8, scoped, tag = 'scoped memory for tpu_custom_call.1']
    #allocation6 [shape = 's32[2]{0}', space=sflag, size = 0x8, scoped, tag = 'scoped memory for tpu_custom_call.1']
    #allocation7 [shape = 'u8[4096]{0}', space=vmem, size = 0x1000, scoped, tag = 'input window, operand 2, single buffered']
    #allocation8 [shape = 's32[1]{0}', space=sflag, size = 0x4, scoped, tag = 'scoped memory for tpu_custom_call.1']
    #allocation9 [shape = 'u8[8192]{0}', space=vmem, size = 0x2000, scoped, tag = 'output window, operand 0']
    %9 = vsyncpa [#allocation5], 0
    %s10 = scalar_lea.sflag [#allocation5], 1
    %11 = vsyncpa %s10, 0
    %12 = vsyncpa [#allocation8], 0
    %13 = vsyncpa [#allocation6], 0
    %s14 = scalar_lea.sflag [#allocation6], 1
    %15 = vsyncpa %s14, 0
    loop: start=0, step=1, limit=4
    $region2: #{tpu_custom_call.1} parent=1 // loop_pre_header
      _
    $region3: #{tpu_custom_call.1} parent=1 // loop_header
      %s17 = sphi 0, %s21
      %p18 = scmp.ge.s32.totalorder %s17, 4
      %s24 = sphi 0, %s36
      %s25 = sphi 0, %s32
      %s26 = sphi 0, %s24
      %s27 = sphi 0, %s25
      %s28 = sphi 0, %s26
      %s29 = sphi 0, %s27
      %s41 = sphi 0, %s43
      %s44 = sphi 0, %s41
      %s45 = sphi 0, %s44
      %s61 = sphi 0, %s45
      %s67 = sphi 0, %s69
      %s70 = sphi 0, %s67
      %s71 = sphi 0, %s70
      %s87 = sphi 0, %s71
      %s95 = sphi 0, %s97
      %s98 = sphi 0, %s95
      %s99 = sphi 0, %s98
      %s115 = sphi 0, %s99
    $region4: #{tpu_custom_call.1} parent=1 // loop_header_branch
      %20 = sbr.rel (%p18) target = $region8
    $region5: #{tpu_custom_call.1} parent=1 // loop_body
      %s22 = ssub.s32 %s17, 1
      %s23 = ssub.s32 %s17, 2
      %s30 = sadd.s32 1, %s25
      %p31 = scmp.ge.s32.totalorder %s30, 2
      %s32 = scalar_select %p31, 0, %s30
      %s33 = sadd.s32 1, %s24
      %s34 = scalar_select %p31, %s33, %s24
      %p35 = scmp.ge.s32.totalorder %s34, 1
      %s36 = scalar_select %p35, 0, %s34
      %s37 = ssub.s32 %s25, %s32
      %s38 = ssub.s32 %s24, %s36
      %s39 = sor.u32 %s37, %s38
      %p40 = scmp.eq.s32.totalorder %s39, 0
      %s42 = sadd.s32 %s41, 1
      %s43 = scalar_select %p40, %s41, %s42
      %p46 = pneg %p40
      %p47 = scmp.eq.s32.totalorder %s17, 1
      %p48 = por %p46, %p47
      %p49 = scmp.ne.s32.totalorder %s41, %s44
      %p50 = scmp.eq.s32.totalorder %s17, 0
      %p51 = por %p49, %p50
      %p52 = scmp.ne.s32.totalorder %s41, %s44
      %p53 = scmp.eq.s32.totalorder %s22, 1
      %p54 = por %p52, %p53
      %p55 = scmp.ne.s32.totalorder %s44, %s45
      %p56 = scmp.eq.s32.totalorder %s22, 0
      %p57 = por %p55, %p56
      %p58 = scmp.ne.s32.totalorder %s44, %s45
      %p59 = scmp.eq.s32.totalorder %s23, 1
      %p60 = por %p58, %p59
      %p62 = scmp.ne.s32.totalorder %s45, %s61
      %p63 = scmp.eq.s32.totalorder %s23, 0
      %p64 = por %p62, %p63
      %s65 = ssub.s32 %s24, %s36
      %p66 = scmp.eq.s32.totalorder %s65, 0
      %s68 = sadd.s32 %s67, 1
      %s69 = scalar_select %p66, %s67, %s68
      %p72 = pneg %p66
      %p73 = scmp.eq.s32.totalorder %s17, 1
      %p74 = por %p72, %p73
      %p75 = scmp.ne.s32.totalorder %s67, %s70
      %p76 = scmp.eq.s32.totalorder %s17, 0
      %p77 = por %p75, %p76
      %p78 = scmp.ne.s32.totalorder %s67, %s70
      %p79 = scmp.eq.s32.totalorder %s22, 1
      %p80 = por %p78, %p79
      %p81 = scmp.ne.s32.totalorder %s70, %s71
      %p82 = scmp.eq.s32.totalorder %s22, 0
      %p83 = por %p81, %p82
      %p84 = scmp.ne.s32.totalorder %s70, %s71
      %p85 = scmp.eq.s32.totalorder %s23, 1
      %p86 = por %p84, %p85
      %p88 = scmp.ne.s32.totalorder %s71, %s87
      %p89 = scmp.eq.s32.totalorder %s23, 0
      %p90 = por %p88, %p89
      %s91 = ssub.s32 %s25, %s32
      %s92 = ssub.s32 %s24, %s36
      %s93 = sor.u32 %s91, %s92
      %p94 = scmp.eq.s32.totalorder %s93, 0
      %s96 = sadd.s32 %s95, 1
      %s97 = scalar_select %p94, %s95, %s96
      %p100 = pneg %p94
      %p101 = scmp.eq.s32.totalorder %s17, 1
      %p102 = por %p100, %p101
      %p103 = scmp.ne.s32.totalorder %s95, %s98
      %p104 = scmp.eq.s32.totalorder %s17, 0
      %p105 = por %p103, %p104
      %p106 = scmp.ne.s32.totalorder %s95, %s98
      %p107 = scmp.eq.s32.totalorder %s22, 1
      %p108 = por %p106, %p107
      %p109 = scmp.ne.s32.totalorder %s98, %s99
      %p110 = scmp.eq.s32.totalorder %s22, 0
      %p111 = por %p109, %p110
      %p112 = scmp.ne.s32.totalorder %s98, %s99
      %p113 = scmp.eq.s32.totalorder %s23, 1
      %p114 = por %p112, %p113
      %p116 = scmp.ne.s32.totalorder %s99, %s115
      %p117 = scmp.eq.s32.totalorder %s23, 0
      %p118 = por %p116, %p117
      %p119 = scmp.le.s32.totalorder 1, %s17
      %p120 = scmp.lt.s32.totalorder %s17, 3
      %p121 = pnand %p119, %p120
      %p122 = pneg %p121
      // Predicated region
      $region9: #{tpu_custom_call.1} parent=5 // pred_check
        _
      $region10: #{tpu_custom_call.1} parent=5 // pred_check_branch
        %124 = sbr.rel (%p121) target = $region12
      $region11: #{tpu_custom_call.1} parent=5 // pred_region
        %s125 = ssub.s32 %s17, 1
        // Predicated region
        $region13: #{tpu_custom_call.1} parent=11 // pred_check
          %p126 = pneg %p83
        $region14: #{tpu_custom_call.1} parent=11 // pred_check_branch
          %128 = sbr.rel (%p126) target = $region16
        $region15: #{tpu_custom_call.1} parent=11 // pred_region
          %s130 = ssub.s32 128, 128
          %131 = vsyncadd [#allocation8], %s130
          %s132 = smul.addr %s26, 128
          %s133 = scalar_lea.hbm %s2, %s132
          %s135 = sshll.u32 [#allocation7], 4
          %s136 = int_to_ptr.vmem [resolvable:$true] %s135
          %138 = dma.hbm_to_vmem [thread:$0]  %s133, 128, %s136, [#allocation8]
        $region16: #{tpu_custom_call.1} parent=11 // pred_fallthru
          _
      $region12: #{tpu_custom_call.1} parent=5 // pred_fallthru
        _
      %p139 = scmp.lt.s32.totalorder %s17, 2
      // Predicated region
      $region17: #{tpu_custom_call.1} parent=5 // pred_check
        %p140 = pneg %p139
      $region18: #{tpu_custom_call.1} parent=5 // pred_check_branch
        %142 = sbr.rel (%p140) target = $region20
      $region19: #{tpu_custom_call.1} parent=5 // pred_region
        // Predicated region
        $region21: #{tpu_custom_call.1} parent=19 // pred_check
          %p143 = pneg %p51
        $region22: #{tpu_custom_call.1} parent=19 // pred_check_branch
          %145 = sbr.rel (%p143) target = $region24
        $region23: #{tpu_custom_call.1} parent=19 // pred_region
          %s146 = sand.u32 %s41, 1
          %s147 = scalar_lea.sflag [#allocation5], %s146
          %s148 = sand.u32 %s41, 1
          %s149 = smul.addr %s148, 8
          %s150 = scalar_lea.vmem [#allocation4], %s149
          %s152 = ssub.s32 128, 128
          %153 = vsyncadd %s147, %s152
          %s154 = sadd.s32 %s24, %s25
          %s155 = smul.addr %s154, 128
          %s156 = scalar_lea.hbm %s1, %s155
          %s158 = sshll.u32 %s150, 4
          %s159 = int_to_ptr.vmem [resolvable:$true] %s158
          %161 = dma.hbm_to_vmem [thread:$0]  %s156, 128, %s159, %s147
        $region24: #{tpu_custom_call.1} parent=19 // pred_fallthru
          _
      $region20: #{tpu_custom_call.1} parent=5 // pred_fallthru
        _
      %p162 = scmp.le.s32.totalorder 1, %s17
      %p163 = scmp.lt.s32.totalorder %s17, 3
      %p164 = pnand %p162, %p163
      %p165 = pneg %p164
      // Predicated region
      $region25: #{tpu_custom_call.1} parent=5 // pred_check
        _
      $region26: #{tpu_custom_call.1} parent=5 // pred_check_branch
        %167 = sbr.rel (%p164) target = $region28
      $region27: #{tpu_custom_call.1} parent=5 // pred_region
        %s168 = ssub.s32 %s17, 1
        %s169 = sand.u32 %s44, 1
        %s170 = scalar_lea.sflag [#allocation5], %s169
        %s171 = sand.u32 %s44, 1
        %s172 = smul.addr %s171, 8
        %s173 = scalar_lea.vmem [#allocation4], %s172
        // Predicated region
        $region29: #{tpu_custom_call.1} parent=27 // pred_check
          %p174 = pneg %p57
        $region30: #{tpu_custom_call.1} parent=27 // pred_check_branch
          %176 = sbr.rel (%p174) target = $region32
        $region31: #{tpu_custom_call.1} parent=27 // pred_region
          %177 = dma.done %s170, 128
        $region32: #{tpu_custom_call.1} parent=27 // pred_fallthru
          _
        // Predicated region
        $region33: #{tpu_custom_call.1} parent=27 // pred_check
          %p178 = pneg %p83
        $region34: #{tpu_custom_call.1} parent=27 // pred_check_branch
          %180 = sbr.rel (%p178) target = $region36
        $region35: #{tpu_custom_call.1} parent=27 // pred_region
          %181 = dma.done [#allocation8], 128
        $region36: #{tpu_custom_call.1} parent=27 // pred_fallthru
          _
        %s182 = sand.u32 %s44, 1
        %s183 = scalar_lea.sflag [#allocation5], %s182
        %s184 = sand.u32 %s44, 1
        %s185 = smul.addr %s184, 8
        %s186 = scalar_lea.vmem [#allocation4], %s185
        %p187 = pneg %p57
        %p188 = pneg %p54
        %p189 = pneg %p83
        %p190 = pneg %p80
        %p191 = pneg %p111
        %p192 = pneg %p108
        %s193 = sand.u32 %s98, 1
        %s194 = scalar_lea.sflag [#allocation6], %s193
        %s195 = sand.u32 %s98, 1
        %s196 = smul.addr %s195, 8
        %s197 = scalar_lea.vmem [#allocation9], %s196
        %v198 = vld [vmem:[%s173] sm:$0xff]
        %v199 = vld [vmem:[#allocation7] sm:$0xff]
        %v200 = vadd.f32 %v198, %v199
        %201 = vst [vmem:[%s197] sm:$0xff] %v200
        %s202 = sand.u32 %s98, 1
        %s203 = scalar_lea.sflag [#allocation6], %s202
        %s204 = sand.u32 %s98, 1
        %s205 = smul.addr %s204, 8
        %s206 = scalar_lea.vmem [#allocation9], %s205
        // Predicated region
        $region37: #{tpu_custom_call.1} parent=27 // pred_check
          %p207 = pneg %p108
        $region38: #{tpu_custom_call.1} parent=27 // pred_check_branch
          %209 = sbr.rel (%p207) target = $region40
        $region39: #{tpu_custom_call.1} parent=27 // pred_region
          %s211 = ssub.s32 128, 128
          %212 = vsyncadd %s203, %s211
          %s213 = sadd.s32 %s26, %s27
          %s214 = smul.addr %s213, 128
          %s215 = scalar_lea.hbm %s3, %s214
          %s217 = sshll.u32 %s206, 4
          %s218 = int_to_ptr.vmem [resolvable:$true] %s217
          %220 = dma.vmem_to_hbm [thread:$0]  %s218, 128, %s215, %s203
        $region40: #{tpu_custom_call.1} parent=27 // pred_fallthru
          _
      $region28: #{tpu_custom_call.1} parent=5 // pred_fallthru
        _
      %p221 = scmp.le.s32.totalorder 2, %s17
      // Predicated region
      $region41: #{tpu_custom_call.1} parent=5 // pred_check
        %p222 = pneg %p221
      $region42: #{tpu_custom_call.1} parent=5 // pred_check_branch
        %224 = sbr.rel (%p222) target = $region44
      $region43: #{tpu_custom_call.1} parent=5 // pred_region
        %s225 = ssub.s32 %s17, 2
        // Predicated region
        $region45: #{tpu_custom_call.1} parent=43 // pred_check
          %p226 = pneg %p114
        $region46: #{tpu_custom_call.1} parent=43 // pred_check_branch
          %228 = sbr.rel (%p226) target = $region48
        $region47: #{tpu_custom_call.1} parent=43 // pred_region
          %s229 = sand.u32 %s99, 1
          %s230 = scalar_lea.sflag [#allocation6], %s229
          %s231 = sand.u32 %s99, 1
          %s232 = smul.addr %s231, 8
          %s233 = scalar_lea.vmem [#allocation9], %s232
          %234 = dma.done %s230, 128
        $region48: #{tpu_custom_call.1} parent=43 // pred_fallthru
          _
      $region44: #{tpu_custom_call.1} parent=5 // pred_fallthru
        _
    $region6: #{tpu_custom_call.1} parent=1 // loop_footer
      %s21 = sadd.s32 1, %s17
    $region7: #{tpu_custom_call.1} parent=1 // loop_footer_branch
      %16 = sbr.rel target = $region3
    $region8: #{tpu_custom_call.1} parent=1 // loop_exit
      _
    %235 = vsyncpa [#allocation5], 1
    %s236 = scalar_lea.sflag [#allocation5], 1
    %237 = vsyncpa %s236, 1
    %238 = vsyncpa [#allocation8], 1
    %239 = vsyncpa [#allocation6], 1
    %s240 = scalar_lea.sflag [#allocation6], 1
    %241 = vsyncpa %s240, 1

</llo_original>
